<compile_context>
chip_gen: v7x
topology: tpu7x:2x2x1
jax: 0.10.0
libtpu: 0.0.40
codegen_flags: <defaults>
</compile_context>

<pallas_src>
import functools
import math

import jax
import jax.numpy as jnp
from jax.experimental import pallas as pl
from jax.experimental.pallas import tpu as pltpu

INIT_SIGMA = 0.017  # standard NoisyNet constant


def _round_up(x: int, m: int) -> int:
    return (x + m - 1) // m * m


def _pick_tile(dim: int, preferred: int, align: int):
    """Pick (tile, padded_dim) for one axis.

    Prefers (a) a tile that is a multiple of `align` and divides `dim` exactly
    (no padding), else (b) a single full-extent block when dim <= preferred
    (no padding, allowed by the BlockSpec rules), else (c) `preferred` with the
    dim padded up to a multiple of it.
    """
    preferred = max(align, (preferred // align) * align)
    if dim % align == 0:
        t = min(preferred, dim)
        while dim % t:
            t -= align
        return t, dim
    if dim <= preferred:
        return dim, dim
    return preferred, _round_up(dim, preferred)


def _noisy_linear_kernel(x_ref, w_ref, nw_ref, eps_ref, beff_ref, y_ref, acc_ref):
    """One (i, j, k) grid step: acc += x_tile @ (W + sigma*eps)_tile^T."""
    k = pl.program_id(2)
    nk = pl.num_programs(2)

    @pl.when(k == 0)
    def _():
        acc_ref[...] = jnp.zeros_like(acc_ref)

    # Noise application in f32 on the VPU (exact when streaming f32; for bf16
    # streaming this upconverts, which is also the v5e-friendly path).
    w_eff = (w_ref[...].astype(jnp.float32)
             + nw_ref[...].astype(jnp.float32) * eps_ref[...].astype(jnp.float32))

    # (tm, tk) . (tn, tk) contracted on dim 1 of both operands: MXU matmul with
    # f32 accumulation, no physical transpose of the weight tile.  Operands are
    # cast to the streaming dtype (bf16 in the fast mode, f32 otherwise).
    acc_ref[...] += jax.lax.dot_general(
        x_ref[...], w_eff.astype(x_ref.dtype),
        dimension_numbers=(((1,), (1,)), ((), ())),
        preferred_element_type=jnp.float32)

    @pl.when(k == nk - 1)
    def _():
        y_ref[...] = (acc_ref[...] + beff_ref[...].astype(jnp.float32)).astype(y_ref.dtype)


@functools.partial(
    jax.jit,
    static_argnames=("block_m", "block_n", "block_k", "stream_dtype", "noise"))
def noisy_linear_forward(x, weight, noisy_weight, bias, noisy_bias, key, *,
                         block_m=1024, block_n=512, block_k=512,
                         stream_dtype=jnp.float32, noise=True):
    """Pallas implementation of NoisyLinear.forward.

    Returns (y, (eps_w, eps_b)) so callers / tests can reproduce the exact noise
    realisation.  Set stream_dtype=jnp.bfloat16 to halve the dominant HBM stream
    (f32 accumulation is kept; numerics change at the bf16 level).
    """
    out_features, in_features = weight.shape
    batch = x.shape[0]
    out_dtype = x.dtype

    if noise:
        k_w, k_b = jax.random.split(key)
        eps_w = jax.random.normal(k_w, (out_features, in_features), dtype=jnp.float32)
        eps_b = jax.random.normal(k_b, (out_features,), dtype=jnp.float32)
    else:
        eps_w = jnp.zeros((out_features, in_features), dtype=jnp.float32)
        eps_b = jnp.zeros((out_features,), dtype=jnp.float32)

    # Tiny (out,) bias path: computed once here, added only in the kernel epilogue.
    b_eff = bias.astype(jnp.float32) + noisy_bias.astype(jnp.float32) * eps_b

    # Tile selection: whole batch as one M block when it fits (nm == 1 -> the
    # weight-sized streams are read from HBM exactly once); N/K tiles chosen to
    # divide the real dims so no padding copies are made in the common case.
    tm, m_pad = _pick_tile(batch, block_m, 8)
    tn, n_pad = _pick_tile(out_features, block_n, 128)
    tk, k_pad = _pick_tile(in_features, block_k, 128)

    def _prep2d(a, rows, cols):
        if a.dtype != stream_dtype:
            a = a.astype(stream_dtype)
        pr, pc = (m_pad if rows == batch else n_pad) - rows, k_pad - cols
        if pr or pc:
            a = jnp.pad(a, ((0, pr), (0, pc)))
        return a

    xp = _prep2d(x, batch, in_features)
    wp = _prep2d(weight, out_features, in_features)
    nwp = _prep2d(noisy_weight, out_features, in_features)
    epsp = _prep2d(eps_w, out_features, in_features)

    beff_p = b_eff
    if n_pad != out_features:
        beff_p = jnp.pad(beff_p, (0, n_pad - out_features))
    beff_p = beff_p.reshape(1, n_pad)

    grid = (m_pad // tm, n_pad // tn, k_pad // tk)

    y_pad = pl.pallas_call(
        _noisy_linear_kernel,
        out_shape=jax.ShapeDtypeStruct((m_pad, n_pad), out_dtype),
        grid_spec=pltpu.PrefetchScalarGridSpec(
            num_scalar_prefetch=0,
            grid=grid,
            in_specs=[
                pl.BlockSpec((tm, tk), lambda i, j, k: (i, k)),   # x
                pl.BlockSpec((tn, tk), lambda i, j, k: (j, k)),   # W
                pl.BlockSpec((tn, tk), lambda i, j, k: (j, k)),   # sigma_W
                pl.BlockSpec((tn, tk), lambda i, j, k: (j, k)),   # eps_W
                pl.BlockSpec((1, tn), lambda i, j, k: (0, j)),    # b_eff
            ],
            out_specs=pl.BlockSpec((tm, tn), lambda i, j, k: (i, j)),
            scratch_shapes=[pltpu.VMEM((tm, tn), jnp.float32)],
        ),
        compiler_params=pltpu.CompilerParams(
            dimension_semantics=("parallel", "parallel", "arbitrary"),
            vmem_limit_bytes=48 * 1024 * 1024,
        ),
    )(xp, wp, nwp, epsp, beff_p)

    y = y_pad
    if m_pad != batch or n_pad != out_features:
        y = y[:batch, :out_features]
    return y, (eps_w, eps_b)


def init_noisy_linear_params(key, in_features, out_features,
                             initial_sigma=INIT_SIGMA):
    """Parameter init matching NoisyLinear.reset_parameters()."""
    bound = math.sqrt(3.0 / in_features)
    k_w, k_b = jax.random.split(key)
    weight = jax.random.uniform(k_w, (out_features, in_features),
                                minval=-bound, maxval=bound, dtype=jnp.float32)
    noisy_weight = jnp.full((out_features, in_features), initial_sigma,
                            dtype=jnp.float32)
    bias = jax.random.uniform(k_b, (out_features,),
                              minval=-bound, maxval=bound, dtype=jnp.float32)
    noisy_bias = jnp.full((out_features,), initial_sigma, dtype=jnp.float32)
    return weight, noisy_weight, bias, noisy_bias


if __name__ == "__main__":
    key = jax.random.PRNGKey(0)
    k_p1, k_x1, k_n1, k_p2, k_x2, k_n2 = jax.random.split(key, 6)

    # --- Test 1: tiny DQN-style layer, single-block grid, exact f32 semantics. ---
    batch, in_features, out_features = 8, 32, 64
    weight, noisy_weight, bias, noisy_bias = init_noisy_linear_params(
        k_p1, in_features, out_features)
    x = jax.random.normal(k_x1, (batch, in_features), dtype=jnp.float32)

    y, (eps_w, eps_b) = noisy_linear_forward(
        x, weight, noisy_weight, bias, noisy_bias, k_n1)
    y = jax.block_until_ready(y)

    y_ref = x @ (weight + noisy_weight * eps_w).T + (bias + noisy_bias * eps_b)
    assert y.shape == (batch, out_features)
    assert bool(jnp.isfinite(y).all())
    assert jnp.allclose(y, y_ref, atol=1e-3, rtol=1e-3), float(
        jnp.max(jnp.abs(y - y_ref)))

    # --- Test 2: multi-block grid (exercises K accumulation + epilogue). ---
    batch, in_features, out_features = 16, 256, 256
    weight, noisy_weight, bias, noisy_bias = init_noisy_linear_params(
        k_p2, in_features, out_features)
    x = jax.random.normal(k_x2, (batch, in_features), dtype=jnp.float32)

    y, (eps_w, eps_b) = noisy_linear_forward(
        x, weight, noisy_weight, bias, noisy_bias, k_n2,
        block_n=128, block_k=128)
    y = jax.block_until_ready(y)

    y_ref = x @ (weight + noisy_weight * eps_w).T + (bias + noisy_bias * eps_b)
    assert jnp.allclose(y, y_ref, atol=2e-3, rtol=2e-3), float(
        jnp.max(jnp.abs(y - y_ref)))

    # --- Test 3: bf16 weight/noise streaming (perf mode), loose tolerance. ---
    y16, _ = noisy_linear_forward(
        x, weight, noisy_weight, bias, noisy_bias, k_n2,
        block_n=128, block_k=128, stream_dtype=jnp.bfloat16)
    y16 = jax.block_until_ready(y16)
    assert jnp.allclose(y16, y_ref, atol=5e-2, rtol=5e-2), float(
        jnp.max(jnp.abs(y16 - y_ref)))

    print("KERNEL_OK")
</pallas_src>

<mosaic_0001>
module attributes {stable_mosaic.version = 11 : i64} {
  func.func @_noisy_linear_kernel(%arg0: i32, %arg1: i32, %arg2: i32, %arg3: memref<8x32xf32, #tpu.memory_space<vmem>>, %arg4: memref<64x32xf32, #tpu.memory_space<vmem>>, %arg5: memref<64x32xf32, #tpu.memory_space<vmem>>, %arg6: memref<64x32xf32, #tpu.memory_space<vmem>>, %arg7: memref<1x64xf32, #tpu.memory_space<vmem>>, %arg8: memref<8x64xf32, #tpu.memory_space<vmem>>, %arg9: memref<8x64xf32, #tpu.memory_space<vmem>>) attributes {dimension_semantics = [#tpu.dimension_semantics<parallel>, #tpu.dimension_semantics<parallel>, #tpu.dimension_semantics<arbitrary>], iteration_bounds = array<i64: 1, 1, 1>, scalar_prefetch = 0 : i64, scratch_operands = 1 : i64, tpu.core_type = #tpu.core_type<tc>, window_params = [{transform_indices = @transform_0, window_bounds = array<i64: 8, 32>}, {transform_indices = @transform_1, window_bounds = array<i64: 64, 32>}, {transform_indices = @transform_2, window_bounds = array<i64: 64, 32>}, {transform_indices = @transform_3, window_bounds = array<i64: 64, 32>}, {transform_indices = @transform_4, window_bounds = array<i64: 1, 64>}, {transform_indices = @transform_5, window_bounds = array<i64: 8, 64>}]} {
    %c0_i32 = arith.constant 0 : i32
    %0 = arith.cmpi eq, %arg2, %c0_i32 : i32
    %1 = arith.extui %0 : i1 to i32
    %c0_i32_0 = arith.constant 0 : i32
    %2 = arith.cmpi ne, %1, %c0_i32_0 : i32
    scf.if %2 {
      %cst_14 = arith.constant 0.000000e+00 : f32
      %16 = vector.broadcast %cst_14 : f32 to vector<8x64xf32>
      %c0_15 = arith.constant 0 : index
      %c0_16 = arith.constant 0 : index
      %17 = vector.load %arg9[%c0_15, %c0_16] : memref<8x64xf32, #tpu.memory_space<vmem>>, vector<8x64xf32>
      tpu.vector_store %arg9[%c0_15, %c0_16], %16 {strides = array<i32>} : memref<8x64xf32, #tpu.memory_space<vmem>>, vector<8x64xf32>,
    } else {
    }
    %c0 = arith.constant 0 : index
    %c0_1 = arith.constant 0 : index
    %3 = vector.load %arg4[%c0, %c0_1] : memref<64x32xf32, #tpu.memory_space<vmem>>, vector<64x32xf32>
    %c0_2 = arith.constant 0 : index
    %c0_3 = arith.constant 0 : index
    %4 = vector.load %arg5[%c0_2, %c0_3] : memref<64x32xf32, #tpu.memory_space<vmem>>, vector<64x32xf32>
    %c0_4 = arith.constant 0 : index
    %c0_5 = arith.constant 0 : index
    %5 = vector.load %arg6[%c0_4, %c0_5] : memref<64x32xf32, #tpu.memory_space<vmem>>, vector<64x32xf32>
    %6 = arith.mulf %4, %5 : vector<64x32xf32>
    %7 = arith.addf %3, %6 : vector<64x32xf32>
    %c0_6 = arith.constant 0 : index
    %c0_7 = arith.constant 0 : index
    %8 = vector.load %arg9[%c0_6, %c0_7] : memref<8x64xf32, #tpu.memory_space<vmem>>, vector<8x64xf32>
    %c0_8 = arith.constant 0 : index
    %c0_9 = arith.constant 0 : index
    %9 = vector.load %arg3[%c0_8, %c0_9] : memref<8x32xf32, #tpu.memory_space<vmem>>, vector<8x32xf32>
    %cst = arith.constant dense<0.000000e+00> : vector<8x64xf32>
    %10 = tpu.matmul %9, %7, %cst {dimension_numbers = #tpu.dot_dimension_numbers<[1], [1], [0], [0], [0, 0, 1, 0], [], []>} : vector<8x32xf32>, vector<64x32xf32>, vector<8x64xf32> -> vector<8x64xf32>
    %11 = arith.addf %8, %10 : vector<8x64xf32>
    %c0_10 = arith.constant 0 : index
    %c0_11 = arith.constant 0 : index
    %12 = vector.load %arg9[%c0_10, %c0_11] : memref<8x64xf32, #tpu.memory_space<vmem>>, vector<8x64xf32>
    tpu.vector_store %arg9[%c0_10, %c0_11], %11 {strides = array<i32>} : memref<8x64xf32, #tpu.memory_space<vmem>>, vector<8x64xf32>,
    %c0_i32_12 = arith.constant 0 : i32
    %13 = arith.cmpi eq, %arg2, %c0_i32_12 : i32
    %14 = arith.extui %13 : i1 to i32
    %c0_i32_13 = arith.constant 0 : i32
    %15 = arith.cmpi ne, %14, %c0_i32_13 : i32
    scf.if %15 {
      %c0_14 = arith.constant 0 : index
      %c0_15 = arith.constant 0 : index
      %16 = vector.load %arg9[%c0_14, %c0_15] : memref<8x64xf32, #tpu.memory_space<vmem>>, vector<8x64xf32>
      %c0_16 = arith.constant 0 : index
      %c0_17 = arith.constant 0 : index
      %17 = vector.load %arg7[%c0_16, %c0_17] : memref<1x64xf32, #tpu.memory_space<vmem>>, vector<1x64xf32>
      %18 = vector.broadcast %17 : vector<1x64xf32> to vector<8x64xf32>
      %19 = arith.addf %16, %18 : vector<8x64xf32>
      %c0_18 = arith.constant 0 : index
      %c0_19 = arith.constant 0 : index
      %20 = vector.load %arg8[%c0_18, %c0_19] : memref<8x64xf32, #tpu.memory_space<vmem>>, vector<8x64xf32>
      tpu.vector_store %arg8[%c0_18, %c0_19], %19 {strides = array<i32>} : memref<8x64xf32, #tpu.memory_space<vmem>>, vector<8x64xf32>,
    } else {
    }
    return
  }
  func.func @transform_0(%arg0: i32, %arg1: i32, %arg2: i32) -> (i32, i32) {
    %c0_i32 = arith.constant 0 : i32
    return %arg0, %arg2 : i32, i32
  }
  func.func @transform_1(%arg0: i32, %arg1: i32, %arg2: i32) -> (i32, i32) {
    %c0_i32 = arith.constant 0 : i32
    return %arg1, %arg2 : i32, i32
  }
  func.func @transform_2(%arg0: i32, %arg1: i32, %arg2: i32) -> (i32, i32) {
    %c0_i32 = arith.constant 0 : i32
    return %arg1, %arg2 : i32, i32
  }
  func.func @transform_3(%arg0: i32, %arg1: i32, %arg2: i32) -> (i32, i32) {
    %c0_i32 = arith.constant 0 : i32
    return %arg1, %arg2 : i32, i32
  }
  func.func @transform_4(%arg0: i32, %arg1: i32, %arg2: i32) -> (i32, i32) {
    %c0_i32 = arith.constant 0 : i32
    %c0_i32_0 = arith.constant 0 : i32
    return %c0_i32, %arg1 : i32, i32
  }
  func.func @transform_5(%arg0: i32, %arg1: i32, %arg2: i32) -> (i32, i32) {
    %c0_i32 = arith.constant 0 : i32
    return %arg0, %arg1 : i32, i32
  }
}

</mosaic_0001>

<llo_original>
// kernel: noisy_linear_forward.3
$region0: #{noisy_linear_forward.3}
  #allocation0 [shape = 'u32[]', space=smem, size = 0x4, offset = 0x4, fixed_abs, tag = 'smem constant byte address 0x4 - core index']
  #allocation1 [shape = 'u32[144,128]{1,0:T(1,128)}', space=vmem, size = 0x12000, scoped, tag = 'internal scratch']
  #allocation2 [shape = 'f32[8,64]{1,0:T(8,128)}', space=vmem, size = 0x1000, scoped, tag = 'scratch operand']
  %s0 = inlined_call_operand.vmem [shape: f32[8,32], index: 0, kind: input, shape index: {}]
  %s1 = inlined_call_operand.vmem [shape: f32[64,32], index: 1, kind: input, shape index: {}]
  %s2 = inlined_call_operand.vmem [shape: f32[64,32], index: 2, kind: input, shape index: {}]
  %s3 = inlined_call_operand.vmem [shape: f32[64,32], index: 3, kind: input, shape index: {}]
  %s4 = inlined_call_operand.vmem [shape: f32[1,64], index: 4, kind: input, shape index: {}]
  %s5 = inlined_call_operand.hbm [shape: f32[8,64], index: 5, kind: output, shape index: {}]
  %s6 = sld [smem:[#allocation0]]
  $region38: #{noisy_linear_forward.3} parent=0
    _
  %s8 = ssub.s32 1, %s6
  %s9 = scalar_select 0, %s8, %s6
  $region1: #{noisy_linear_forward.3} parent=0
    #allocation3 [shape = 'u8[4096]{0}', space=vmem, size = 0x1000, scoped, tag = 'output window, operand 0, single buffered']
    #allocation4 [shape = 's32[1]{0}', space=sflag, size = 0x4, scoped, tag = 'scoped memory for noisy_linear_forward.3']
    %10 = vsyncpa [#allocation4], 0
    // Predicated region
    $region2: #{noisy_linear_forward.3} parent=1 // pred_check
      _
    $region3: #{noisy_linear_forward.3} parent=1 // pred_check_branch
      %12 = sbr.rel (0) target = $region5
    $region4: #{noisy_linear_forward.3} parent=1 // pred_region
      _
    $region5: #{noisy_linear_forward.3} parent=1 // pred_fallthru
      _
    // Predicated region
    $region6: #{noisy_linear_forward.3} parent=1 // pred_check
      _
    $region7: #{noisy_linear_forward.3} parent=1 // pred_check_branch
      %14 = sbr.rel (0) target = $region9
    $region8: #{noisy_linear_forward.3} parent=1 // pred_region
      _
    $region9: #{noisy_linear_forward.3} parent=1 // pred_fallthru
      _
    // Predicated region
    $region10: #{noisy_linear_forward.3} parent=1 // pred_check
      _
    $region11: #{noisy_linear_forward.3} parent=1 // pred_check_branch
      %16 = sbr.rel (0) target = $region13
    $region12: #{noisy_linear_forward.3} parent=1 // pred_region
      _
    $region13: #{noisy_linear_forward.3} parent=1 // pred_fallthru
      _
    // Predicated region
    $region14: #{noisy_linear_forward.3} parent=1 // pred_check
      _
    $region15: #{noisy_linear_forward.3} parent=1 // pred_check_branch
      %18 = sbr.rel (0) target = $region17
    $region16: #{noisy_linear_forward.3} parent=1 // pred_region
      _
    $region17: #{noisy_linear_forward.3} parent=1 // pred_fallthru
      _
    // Predicated region
    $region18: #{noisy_linear_forward.3} parent=1 // pred_check
      _
    $region19: #{noisy_linear_forward.3} parent=1 // pred_check_branch
      %20 = sbr.rel (0) target = $region21
    $region20: #{noisy_linear_forward.3} parent=1 // pred_region
      _
    $region21: #{noisy_linear_forward.3} parent=1 // pred_fallthru
      _
    %p21 = scmp.eq.s32.totalorder 0, 0
    // Predicated region
    $region22: #{noisy_linear_forward.3} parent=1 // pred_check
      %p22 = pneg %p21
    $region23: #{noisy_linear_forward.3} parent=1 // pred_check_branch
      %24 = sbr.rel (%p22) target = $region25
    $region24: #{noisy_linear_forward.3} parent=1 // pred_region
      %vm25 = vcmask 523264
      %26 = vst.msk [vmem:[#allocation2] sm:$0xff] %vm25, 0.0
    $region25: #{noisy_linear_forward.3} parent=1 // pred_fallthru
      _
    %v27 = vld [vmem:[%s1] sm:$0xff]
    %v28 = vld [vmem:[%s1 + $0x8] sm:$0xff]
    %v29 = vld [vmem:[%s1 + $0x10] sm:$0xff]
    %v30 = vld [vmem:[%s1 + $0x18] sm:$0xff]
    %v31 = vld [vmem:[%s1 + $0x20] sm:$0xff]
    %v32 = vld [vmem:[%s1 + $0x28] sm:$0xff]
    %v33 = vld [vmem:[%s1 + $0x30] sm:$0xff]
    %v34 = vld [vmem:[%s1 + $0x38] sm:$0xff]
    %v35 = vld [vmem:[%s2] sm:$0xff]
    %v36 = vld [vmem:[%s2 + $0x8] sm:$0xff]
    %v37 = vld [vmem:[%s2 + $0x10] sm:$0xff]
    %v38 = vld [vmem:[%s2 + $0x18] sm:$0xff]
    %v39 = vld [vmem:[%s2 + $0x20] sm:$0xff]
    %v40 = vld [vmem:[%s2 + $0x28] sm:$0xff]
    %v41 = vld [vmem:[%s2 + $0x30] sm:$0xff]
    %v42 = vld [vmem:[%s2 + $0x38] sm:$0xff]
    %v43 = vld [vmem:[%s3] sm:$0xff]
    %v44 = vld [vmem:[%s3 + $0x8] sm:$0xff]
    %v45 = vld [vmem:[%s3 + $0x10] sm:$0xff]
    %v46 = vld [vmem:[%s3 + $0x18] sm:$0xff]
    %v47 = vld [vmem:[%s3 + $0x20] sm:$0xff]
    %v48 = vld [vmem:[%s3 + $0x28] sm:$0xff]
    %v49 = vld [vmem:[%s3 + $0x30] sm:$0xff]
    %v50 = vld [vmem:[%s3 + $0x38] sm:$0xff]
    %v51 = vmul.f32 %v35, %v43
    %v52 = vmul.f32 %v36, %v44
    %v53 = vmul.f32 %v37, %v45
    %v54 = vmul.f32 %v38, %v46
    %v55 = vmul.f32 %v39, %v47
    %v56 = vmul.f32 %v40, %v48
    %v57 = vmul.f32 %v41, %v49
    %v58 = vmul.f32 %v42, %v50
    %v59 = vadd.f32 %v27, %v51
    %v60 = vadd.f32 %v28, %v52
    %v61 = vadd.f32 %v29, %v53
    %v62 = vadd.f32 %v30, %v54
    %v63 = vadd.f32 %v31, %v55
    %v64 = vadd.f32 %v32, %v56
    %v65 = vadd.f32 %v33, %v57
    %v66 = vadd.f32 %v34, %v58
    %v67 = vld [vmem:[#allocation2] sm:$0xff]
    %v68 = vld [vmem:[%s0] sm:$0xff]
    %vm69 = vcmask 261120
    %v71 = vsel %vm69, %v68, 0
    %v74 = vsel %vm69, %v59, 0
    %v77 = vsel %vm69, %v60, 0
    %v80 = vsel %vm69, %v61, 0
    %v83 = vsel %vm69, %v62, 0
    %v86 = vsel %vm69, %v63, 0
    %v89 = vsel %vm69, %v64, 0
    %v92 = vsel %vm69, %v65, 0
    %v95 = vsel %vm69, %v66, 0
    %97 = vmatprep.subr.mxu0 0.0
    %98 = vmatpush1.xpose.msra.mxu0 %v74
    %99 = vmatprep.subr.mxu0 0.0
    %100 = vmatpush1.xpose.msra.mxu0 %v77
    %101 = vmatprep.subr.mxu0 0.0
    %102 = vmatpush1.xpose.msra.mxu0 %v80
    %103 = vmatprep.subr.mxu0 0.0
    %104 = vmatpush1.xpose.msra.mxu0 %v83
    %105 = vmatprep.subr.mxu0 0.0
    %106 = vmatpush1.xpose.msra.mxu0 %v86
    %107 = vmatprep.subr.mxu0 0.0
    %108 = vmatpush1.xpose.msra.mxu0 %v89
    %109 = vmatprep.subr.mxu0 0.0
    %110 = vmatpush1.xpose.msra.mxu0 %v92
    %111 = vmatprep.subr.mxu0 0.0
    %112 = vmatpush1.xpose.msra.mxu0 %v95
    %113 = vmatprep.subr.mxu0 0.0
    %114 = vmatpush1.xpose.msra.mxu0 0.0
    %115 = vmatprep.subr.mxu0 0.0
    %116 = vmatpush1.xpose.msra.mxu0 0.0
    %117 = vmatprep.subr.mxu0 0.0
    %118 = vmatpush1.xpose.msra.mxu0 0.0
    %119 = vmatprep.subr.mxu0 0.0
    %120 = vmatpush1.xpose.msra.mxu0 0.0
    %121 = vmatprep.subr.mxu0 0.0
    %122 = vmatpush1.xpose.msra.mxu0 0.0
    %123 = vmatprep.subr.mxu0 0.0
    %124 = vmatpush1.xpose.msra.mxu0 0.0
    %125 = vmatprep.subr.mxu0 0.0
    %126 = vmatpush1.xpose.msra.mxu0 0.0
    %127 = vmatprep.subr.mxu0 0.0
    %128 = vmatpush1.xpose.msra.mxu0 0.0
    %129 = vmatprep.subr.mxu0 0.0
    %130 = vmatpush1.xpose.msra.mxu0 0.0
    %131 = vmatprep.subr.mxu0 0.0
    %132 = vmatpush1.xpose.msra.mxu0 0.0
    %133 = vmatprep.subr.mxu0 0.0
    %134 = vmatpush1.xpose.msra.mxu0 0.0
    %135 = vmatprep.subr.mxu0 0.0
    %136 = vmatpush1.xpose.msra.mxu0 0.0
    %137 = vmatprep.subr.mxu0 0.0
    %138 = vmatpush1.xpose.msra.mxu0 0.0
    %139 = vmatprep.subr.mxu0 0.0
    %140 = vmatpush1.xpose.msra.mxu0 0.0
    %141 = vmatprep.subr.mxu0 0.0
    %142 = vmatpush1.xpose.msra.mxu0 0.0
    %143 = vmatprep.subr.mxu0 0.0
    %144 = vmatpush1.xpose.msra.mxu0 0.0
    %145 = vmatprep.subr.mxu0 0.0
    %146 = vmatpush1.xpose.msra.mxu0 0.0
    %147 = vmatprep.subr.mxu0 0.0
    %148 = vmatpush1.xpose.msra.mxu0 0.0
    %149 = vmatprep.subr.mxu0 0.0
    %150 = vmatpush1.xpose.msra.mxu0 0.0
    %151 = vmatprep.subr.mxu0 0.0
    %152 = vmatpush1.xpose.msra.mxu0 0.0
    %153 = vmatprep.subr.mxu0 0.0
    %154 = vmatpush1.xpose.msra.mxu0 0.0
    %155 = vmatprep.subr.mxu0 0.0
    %156 = vmatpush1.xpose.msra.mxu0 0.0
    %157 = vmatprep.subr.mxu0 0.0
    %158 = vmatpush1.xpose.msra.mxu0 0.0
    %159 = vmatprep.subr.mxu0 0.0
    %160 = vmatpush1.xpose.msra.mxu0 0.0
    %161 = vmatprep.mubr.f32.mxu0 0.0
    %162 = vmatmul.mubr.f32.gmra.mrb[0].mxu0 %v71
    %v163 = vpop.f32.mrb[0].mxu0
    %v164 = vadd.f32 0.0, %v163
    %v165 = vpop.f32.mrb[0].mxu0
    %166 = vdwg.mxu0
    %v167 = vadd.f32 %v67, %v164
    %vm168 = vcmask 523264
    %169 = vst.msk [vmem:[#allocation2] sm:$0xff] %vm168, %v167
    // Predicated region
    $region26: #{noisy_linear_forward.3} parent=1 // pred_check
      %p170 = pneg %p21
    $region27: #{noisy_linear_forward.3} parent=1 // pred_check_branch
      %172 = sbr.rel (%p170) target = $region29
    $region28: #{noisy_linear_forward.3} parent=1 // pred_region
      %v173 = vld [vmem:[#allocation2] sm:$0xff]
      %v174 = vld [vmem:[%s4] sm:$0x1]
      %v176 = vlaneseq
      %v177 = vshrl.u32 %v176, 7
      %v178 = vsub.s32 0, %v177
      %v179 = vrot.slane %v174, %v178
      %v181 = vadd.f32 %v173, %v179
      %182 = vst.msk [vmem:[#allocation3] sm:$0xff] %vm168, %v181
    $region29: #{noisy_linear_forward.3} parent=1 // pred_fallthru
      _
    // Predicated region
    $region30: #{noisy_linear_forward.3} parent=1 // pred_check
      _
    $region31: #{noisy_linear_forward.3} parent=1 // pred_check_branch
      %184 = sbr.rel (0) target = $region33
    $region32: #{noisy_linear_forward.3} parent=1 // pred_region
      %s186 = ssub.s32 128, 128
      %187 = vsyncadd [#allocation4], %s186
      %s189 = sshll.u32 [#allocation3], 4
      %s190 = int_to_ptr.vmem [resolvable:$true] %s189
      %192 = dma.vmem_to_hbm [thread:$0]  %s190, 128, %s5, [#allocation4]
    $region33: #{noisy_linear_forward.3} parent=1 // pred_fallthru
      _
    // Predicated region
    $region34: #{noisy_linear_forward.3} parent=1 // pred_check
      _
    $region35: #{noisy_linear_forward.3} parent=1 // pred_check_branch
      %194 = sbr.rel (0) target = $region37
    $region36: #{noisy_linear_forward.3} parent=1 // pred_region
      %195 = dma.done [#allocation4], 128
    $region37: #{noisy_linear_forward.3} parent=1 // pred_fallthru
      _
    %196 = vsyncpa [#allocation4], 1

</llo_original>
